<compile_context>
chip_gen: v7x
topology: tpu7x:2x2x1
jax: 0.10.0
libtpu: 0.0.40
codegen_flags: <defaults>
</compile_context>

<pallas_src>
import math

import jax
import jax.numpy as jnp
from jax.experimental import pallas as pl
from jax.experimental.pallas import tpu as pltpu


def _identity_kernel(x_ref, o_ref):
    # Straight pass-through on the current VMEM tile; HBM<->VMEM movement is
    # handled by the BlockSpec pipeline DMAs.
    o_ref[...] = x_ref[...]


_LANE = 128
_MAX_LANE_WIDTH = 8192                 # cap L so a single row stays small (<=32 KiB f32)
_TARGET_TILE_BYTES = 4 * 1024 * 1024   # ~4 MiB/tile -> ~16 MiB live (in+out, dbl-buffered)
_VMEM_LIMIT_BYTES = 32 * 1024 * 1024   # explicit headroom; < v7x 64 MiB physical VMEM


def _sublane_multiple(dtype) -> int:
    # Sublane quantum of the tiled VMEM layout: 8 (f32), 16 (bf16), 32 (int8).
    return max(8, 32 // jnp.dtype(dtype).itemsize)


def _padded_block_bytes(block_shape, dtype) -> int:
    """VMEM bytes of one block in the (8,128)/dtype-tiled layout (not raw bytes)."""
    itemsize = jnp.dtype(dtype).itemsize
    sub = _sublane_multiple(dtype)
    dims = list(block_shape)
    if len(dims) == 1:
        dims = [1] + dims
    dims[-1] = -(-dims[-1] // _LANE) * _LANE
    dims[-2] = -(-dims[-2] // sub) * sub
    return math.prod(dims) * itemsize


def _pick_lane_width(total: int) -> int:
    """Largest multiple of 128 that divides `total`, capped; 0 if none."""
    best = 0
    lane = _LANE
    cap = min(total, _MAX_LANE_WIDTH)
    while lane <= cap:
        if total % lane == 0:
            best = lane
        lane += _LANE
    return best


def _copy_2d(x2: jax.Array, alias: bool) -> jax.Array:
    """Lane-dense copy of a (R, L) slab with L % 128 == 0."""
    R, L = x2.shape
    dtype = x2.dtype
    sub = _sublane_multiple(dtype)
    row_bytes = L * jnp.dtype(dtype).itemsize  # padded == raw: L is a multiple of 128

    b0 = max(1, _TARGET_TILE_BYTES // row_bytes)
    if R >= 2:
        # v7x megacore: keep at least 2 steps on the "parallel" grid axis.
        b0 = min(b0, -(-R // 2))
    b0 = min(b0, R)
    if b0 < R:
        # (8,128) legality: the sublane block dim must be a multiple of the
        # dtype sublane quantum unless it spans the full array dim.
        b0 = min(R, max(sub, (b0 // sub) * sub))

    grid = (pl.cdiv(R, b0),)  # Pallas masks the ragged last block.
    return pl.pallas_call(
        _identity_kernel,
        out_shape=jax.ShapeDtypeStruct((R, L), dtype),
        grid_spec=pltpu.PrefetchScalarGridSpec(
            num_scalar_prefetch=0,
            grid=grid,
            in_specs=[pl.BlockSpec((b0, L), lambda i: (i, 0))],
            out_specs=pl.BlockSpec((b0, L), lambda i: (i, 0)),
        ),
        input_output_aliases=({0: 0} if alias else {}),
        compiler_params=pltpu.CompilerParams(
            dimension_semantics=("parallel",),
            vmem_limit_bytes=_VMEM_LIMIT_BYTES,
        ),
    )(x2)


def _copy_nd(x: jax.Array, alias: bool) -> jax.Array:
    """Fallback copy: block only over the leading axis, trailing dims at full extent."""
    n0 = x.shape[0]
    inner = x.shape[1:]
    ndim = x.ndim
    dtype = x.dtype
    sub = _sublane_multiple(dtype)

    # Shrink the leading-axis block until the PADDED VMEM footprint fits the budget.
    b0 = n0
    while b0 > 1 and _padded_block_bytes((b0,) + inner, dtype) > _TARGET_TILE_BYTES:
        b0 = (b0 + 1) // 2
    # v7x megacore: prefer >= 2 grid steps over the "parallel" axis.
    if n0 >= 2 and b0 == n0:
        b0 = (n0 + 1) // 2
    # (8,128) legality when the leading axis is also the sublane axis (ndim == 2).
    if ndim == 2 and 0 < b0 < n0:
        b0 = min(n0, max(sub, (b0 // sub) * sub))
    # TODO(synk): if a single (1, *inner) PADDED slab still exceeds the VMEM
    # budget (huge C with tiny H,W), add a second grid axis over dim 1.

    grid = (pl.cdiv(n0, b0),)
    block_shape = (b0,) + inner

    def index_map(i):
        return (i,) + (0,) * (ndim - 1)

    return pl.pallas_call(
        _identity_kernel,
        out_shape=jax.ShapeDtypeStruct(x.shape, dtype),
        grid_spec=pltpu.PrefetchScalarGridSpec(
            num_scalar_prefetch=0,
            grid=grid,
            in_specs=[pl.BlockSpec(block_shape, index_map)],
            out_specs=pl.BlockSpec(block_shape, index_map),
        ),
        input_output_aliases=({0: 0} if alias else {}),
        compiler_params=pltpu.CompilerParams(
            dimension_semantics=("parallel",),
            vmem_limit_bytes=_VMEM_LIMIT_BYTES,
        ),
    )(x)


def identity(x: jax.Array, *, use_pallas_copy: bool = True,
             donate_input: bool = False) -> jax.Array:
    """Identity.forward(x) == x.

    The fastest correct implementation is simply `return x`; the Pallas copy
    path (default here, for benchmarking/demonstration) is a pure
    HBM-bandwidth-bound copy.  Set donate_input=True only if the caller
    actually donates x (otherwise aliasing would force a defensive copy).
    """
    if not use_pallas_copy:
        return x
    if x.size == 0:
        return x

    total = x.size
    lane_w = _pick_lane_width(total)
    if lane_w >= _LANE:
        # Free bitcast of a contiguous array into a lane-dense 2-D slab;
        # unmasked full-width vld/vst, no (8,128) padding bloat in VMEM.
        x2 = jnp.reshape(x, (total // lane_w, lane_w))
        y2 = _copy_2d(x2, donate_input)
        return jnp.reshape(y2, x.shape)

    if x.ndim < 2:
        # Tiny 1-D array not divisible by 128: a copy kernel is all overhead;
        # nn.Identity semantics are just "return x".
        return x

    return _copy_nd(x, donate_input)


if __name__ == "__main__":
    key = jax.random.PRNGKey(0)
    # Shape consistent with an encoder feature map: NCHW.
    x = jax.random.normal(key, (2, 4, 16, 16), dtype=jnp.float32)

    # Lane-dense Pallas copy path (size is a multiple of 128).
    y = identity(x)
    jax.block_until_ready(y)
    assert y.shape == x.shape, (y.shape, x.shape)
    assert y.dtype == x.dtype, (y.dtype, x.dtype)
    assert bool(jnp.array_equal(y, x)), "identity mismatch (f32, lane-dense)"

    # Sub-32-bit dtype path.
    xb = x.astype(jnp.bfloat16)
    yb = identity(xb)
    jax.block_until_ready(yb)
    assert yb.dtype == jnp.bfloat16
    assert bool(jnp.array_equal(yb, xb)), "identity mismatch (bf16, lane-dense)"

    # Ragged shape (size not a multiple of 128) -> full-trailing-dims fallback.
    xr = jax.random.normal(jax.random.PRNGKey(1), (4, 3, 7, 5), dtype=jnp.float32)
    yr = identity(xr)
    jax.block_until_ready(yr)
    assert bool(jnp.array_equal(yr, xr)), "identity mismatch (fallback path)"

    # True nn.Identity semantics: pure pass-through, no kernel at all.
    y2 = identity(x, use_pallas_copy=False)
    assert y2 is x

    print("KERNEL_OK")
</pallas_src>

<mosaic_0001>
module attributes {stable_mosaic.version = 11 : i64} {
  func.func @_identity_kernel(%arg0: i32, %arg1: memref<1x2048xf32, #tpu.memory_space<vmem>>, %arg2: memref<1x2048xf32, #tpu.memory_space<vmem>>) attributes {dimension_semantics = [#tpu.dimension_semantics<parallel>], iteration_bounds = array<i64: 1>, scalar_prefetch = 0 : i64, scratch_operands = 0 : i64, tpu.core_type = #tpu.core_type<tc>, window_params = [{transform_indices = @transform_0, window_bounds = array<i64: 1, 2048>}, {transform_indices = @transform_1, window_bounds = array<i64: 1, 2048>}]} {
    %c0 = arith.constant 0 : index
    %c0_0 = arith.constant 0 : index
    %0 = vector.load %arg1[%c0, %c0_0] : memref<1x2048xf32, #tpu.memory_space<vmem>>, vector<1x2048xf32>
    %c0_1 = arith.constant 0 : index
    %c0_2 = arith.constant 0 : index
    %1 = vector.load %arg2[%c0_1, %c0_2] : memref<1x2048xf32, #tpu.memory_space<vmem>>, vector<1x2048xf32>
    tpu.vector_store %arg2[%c0_1, %c0_2], %0 {strides = array<i32>} : memref<1x2048xf32, #tpu.memory_space<vmem>>, vector<1x2048xf32>,
    return
  }
  func.func @transform_0(%arg0: i32) -> (i32, i32) {
    %c0_i32 = arith.constant 0 : i32
    %c0_i32_0 = arith.constant 0 : i32
    return %arg0, %c0_i32 : i32, i32
  }
  func.func @transform_1(%arg0: i32) -> (i32, i32) {
    %c0_i32 = arith.constant 0 : i32
    %c0_i32_0 = arith.constant 0 : i32
    return %arg0, %c0_i32 : i32, i32
  }
}

</mosaic_0001>

<llo_original>
// kernel: tpu_custom_call.1
$region0: #{tpu_custom_call.1}
  #allocation0 [shape = 'u32[]', space=smem, size = 0x4, offset = 0x4, fixed_abs, tag = 'smem constant byte address 0x4 - core index']
  #allocation1 [shape = 'u32[144,128]{1,0:T(1,128)}', space=vmem, size = 0x12000, scoped, tag = 'internal scratch']
  %s0 = inlined_call_operand.hbm [shape: f32[1,2048], index: 0, kind: input, shape index: {}]
  %s1 = inlined_call_operand.hbm [shape: f32[1,2048], index: 1, kind: output, shape index: {}]
  %s2 = sld [smem:[#allocation0]]
  $region18: #{tpu_custom_call.1} parent=0
    _
  %s4 = ssub.s32 1, %s2
  %s5 = scalar_select 0, %s4, %s2
  $region1: #{tpu_custom_call.1} parent=0
    #allocation2 [shape = 'u8[8192]{0}', space=vmem, size = 0x2000, scoped, tag = 'input window, operand 0, single buffered']
    #allocation3 [shape = 's32[1]{0}', space=sflag, size = 0x4, scoped, tag = 'scoped memory for tpu_custom_call.1']
    #allocation4 [shape = 's32[1]{0}', space=sflag, size = 0x4, scoped, tag = 'scoped memory for tpu_custom_call.1']
    #allocation5 [shape = 'u8[8192]{0}', space=vmem, size = 0x2000, scoped, tag = 'output window, operand 0, single buffered']
    %6 = vsyncpa [#allocation3], 0
    %7 = vsyncpa [#allocation4], 0
    // Predicated region
    $region2: #{tpu_custom_call.1} parent=1 // pred_check
      _
    $region3: #{tpu_custom_call.1} parent=1 // pred_check_branch
      %9 = sbr.rel (0) target = $region5
    $region4: #{tpu_custom_call.1} parent=1 // pred_region
      %s11 = ssub.s32 256, 256
      %12 = vsyncadd [#allocation3], %s11
      %s14 = sshll.u32 [#allocation2], 4
      %s15 = int_to_ptr.vmem [resolvable:$true] %s14
      %17 = dma.hbm_to_vmem [thread:$0]  %s0, 256, %s15, [#allocation3]
    $region5: #{tpu_custom_call.1} parent=1 // pred_fallthru
      _
    // Predicated region
    $region6: #{tpu_custom_call.1} parent=1 // pred_check
      _
    $region7: #{tpu_custom_call.1} parent=1 // pred_check_branch
      %19 = sbr.rel (0) target = $region9
    $region8: #{tpu_custom_call.1} parent=1 // pred_region
      %20 = dma.done [#allocation3], 256
    $region9: #{tpu_custom_call.1} parent=1 // pred_fallthru
      _
    %v21 = vld [vmem:[#allocation2] sm:$0xff]
    %v22 = vld [vmem:[#allocation2 + $0x8] sm:$0xff]
    %23 = vst [vmem:[#allocation5] sm:$0xff] %v21
    %24 = vst [vmem:[#allocation5 + $0x8] sm:$0xff] %v22
    // Predicated region
    $region10: #{tpu_custom_call.1} parent=1 // pred_check
      _
    $region11: #{tpu_custom_call.1} parent=1 // pred_check_branch
      %26 = sbr.rel (0) target = $region13
    $region12: #{tpu_custom_call.1} parent=1 // pred_region
      %s28 = ssub.s32 256, 256
      %29 = vsyncadd [#allocation4], %s28
      %s31 = sshll.u32 [#allocation5], 4
      %s32 = int_to_ptr.vmem [resolvable:$true] %s31
      %34 = dma.vmem_to_hbm [thread:$0]  %s32, 256, %s1, [#allocation4]
    $region13: #{tpu_custom_call.1} parent=1 // pred_fallthru
      _
    // Predicated region
    $region14: #{tpu_custom_call.1} parent=1 // pred_check
      _
    $region15: #{tpu_custom_call.1} parent=1 // pred_check_branch
      %36 = sbr.rel (0) target = $region17
    $region16: #{tpu_custom_call.1} parent=1 // pred_region
      %37 = dma.done [#allocation4], 256
    $region17: #{tpu_custom_call.1} parent=1 // pred_fallthru
      _
    %38 = vsyncpa [#allocation3], 1
    %39 = vsyncpa [#allocation4], 1

</llo_original>
